<compile_context>
chip_gen: v6e
topology: v6e:2x2x1
jax: 0.10.0
libtpu: 0.0.40
codegen_flags: <defaults>
</compile_context>

<pallas_src>
import functools

import jax
import jax.numpy as jnp
from jax import lax
from jax.experimental import pallas as pl
from jax.experimental.pallas import tpu as pltpu


# ---------------------------------------------------------------------------
# Kernels: o[b, o, m] = sum_i x[b, i, m] * w[i, o, m]   (complex, per-mode)
# ---------------------------------------------------------------------------

def _ci_fma_loop(xr_ref, xi_ref, wr_ref, wi_ref):
    """FMA over the Ci axis of the current blocks with a vreg-resident f32
    accumulator (no (Ci, Co, Mp) temporaries).  Operands may be bf16 storage;
    they are widened to f32 right after load (portable across v5e/v6e/v7x)."""
    ci, tco, mp = wr_ref.shape

    def body(i, carry):
        acc_r, acc_i = carry
        xr_i = xr_ref[0, pl.ds(i, 1), :].astype(jnp.float32)   # (1, Mp)
        xi_i = xi_ref[0, pl.ds(i, 1), :].astype(jnp.float32)
        wr_i = wr_ref[i].astype(jnp.float32)                   # (tco, Mp)
        wi_i = wi_ref[i].astype(jnp.float32)
        acc_r = acc_r + (xr_i * wr_i - xi_i * wi_i)
        acc_i = acc_i + (xr_i * wi_i + xi_i * wr_i)
        return acc_r, acc_i

    zero = jnp.zeros((tco, mp), jnp.float32)
    unroll = True if ci <= 16 else 8          # partial unroll for large Ci
    return lax.fori_loop(0, ci, body, (zero, zero), unroll=unroll)


def _mix_kernel(xr_ref, xi_ref, wr_ref, wi_ref, or_ref, oi_ref):
    """One (Co-tile, batch) grid step; whole Ci handled in one block."""
    acc_r, acc_i = _ci_fma_loop(xr_ref, xi_ref, wr_ref, wi_ref)
    or_ref[0] = acc_r.astype(or_ref.dtype)
    oi_ref[0] = acc_i.astype(oi_ref.dtype)


def _mix_kernel_kchunk(xr_ref, xi_ref, wr_ref, wi_ref, or_ref, oi_ref,
                       accr_ref, acci_ref):
    """One (Co-tile, batch, Ci-chunk) grid step.  Accumulates across the
    innermost ("arbitrary") Ci-chunk axis in a VMEM f32 scratch."""
    k = pl.program_id(2)

    @pl.when(k == 0)
    def _():
        accr_ref[...] = jnp.zeros_like(accr_ref)
        acci_ref[...] = jnp.zeros_like(acci_ref)

    acc_r, acc_i = _ci_fma_loop(xr_ref, xi_ref, wr_ref, wi_ref)
    accr_ref[...] += acc_r
    acci_ref[...] += acc_i

    @pl.when(k == pl.num_programs(2) - 1)
    def _():
        or_ref[0] = accr_ref[...].astype(or_ref.dtype)
        oi_ref[0] = acci_ref[...].astype(oi_ref.dtype)


# ---------------------------------------------------------------------------
# Tiling / VMEM policy
# ---------------------------------------------------------------------------

def _divisor_tiles(n):
    """Candidate tile sizes for an axis of length n: n itself plus every
    multiple of 8 dividing n (keeps the (8,128) block-shape rule)."""
    cands = {n}
    for t in range(8, n, 8):
        if n % t == 0:
            cands.add(t)
    return sorted(cands, reverse=True)


def _choose_tiles(B, Ci, Co, Mp, in_itemsize):
    """Pick (tci, tco, vmem_limit_bytes) under vreg and VMEM budgets."""
    ACC_BUDGET_ELEMS = 8 * 1024        # per f32 accumulator plane (16 vregs)
    WEIGHT_VMEM_BUDGET = 24 << 20      # double-buffered re+im weight blocks (v7x-safe)
    TOTAL_VMEM_CAP = 48 << 20          # < 64 MiB/TC physical on v7x

    # Co tile: two f32 accumulator planes must stay vreg-resident.
    tco_cands = _divisor_tiles(Co)
    fitting = [t for t in tco_cands if t * Mp <= ACC_BUDGET_ELEMS]
    tco = fitting[0] if fitting else tco_cands[-1]
    # v7x has 2 TensorCores: keep at least one parallel axis with extent >= 2.
    if B == 1 and tco == Co:
        smaller = [t for t in tco_cands if t < Co]
        if smaller:
            tco = smaller[0]

    # Ci tile: double-buffered weight blocks (both planes) must fit the budget.
    def weight_bytes(tci):
        return 2 * 2 * tci * tco * Mp * in_itemsize

    tci_cands = _divisor_tiles(Ci)
    fitting = [t for t in tci_cands if weight_bytes(t) <= WEIGHT_VMEM_BUDGET]
    tci = fitting[0] if fitting else tci_cands[-1]

    # Explicit scoped-VMEM limit covering all double-buffered blocks + scratch.
    x_bytes = 2 * 2 * 1 * tci * Mp * in_itemsize
    out_bytes = 2 * 2 * 1 * tco * Mp * 4
    scratch_bytes = (2 * tco * Mp * 4) if tci != Ci else 0
    total = weight_bytes(tci) + x_bytes + out_bytes + scratch_bytes
    vmem_limit = int(min(max(2 * total, 16 << 20), TOTAL_VMEM_CAP))
    return tci, tco, vmem_limit


# ---------------------------------------------------------------------------
# Pallas wrapper
# ---------------------------------------------------------------------------

def spectral_channel_mix(xr, xi, wr_p, wi_p):
    """o[b,o,m] = sum_i x[b,i,m] * w[i,o,m] on real/imag planes.

    xr/xi : (B, Ci, M)  f32 or bf16
    wr/wi : (Ci, Co, Mp) f32 or bf16, already lane-padded (Mp % 128 == 0)
    Returns (out_r, out_i): (B, Co, M) float32.
    """
    B, Ci, M = xr.shape
    Co, Mp = wr_p.shape[1], wr_p.shape[2]

    if Mp != M:                         # only x is padded per call
        pad = ((0, 0), (0, 0), (0, Mp - M))
        xr = jnp.pad(xr, pad)
        xi = jnp.pad(xi, pad)

    in_itemsize = jnp.dtype(wr_p.dtype).itemsize
    tci, tco, vmem_limit = _choose_tiles(B, Ci, Co, Mp, in_itemsize)

    out_shape = (jax.ShapeDtypeStruct((B, Co, Mp), jnp.float32),
                 jax.ShapeDtypeStruct((B, Co, Mp), jnp.float32))

    if tci == Ci:
        # Co-tiles OUTER, batch INNER -> weight blocks resident across batch.
        grid = (Co // tco, B)
        call = pl.pallas_call(
            _mix_kernel,
            out_shape=out_shape,
            grid=grid,
            in_specs=[
                pl.BlockSpec((1, Ci, Mp), lambda c, b: (b, 0, 0)),
                pl.BlockSpec((1, Ci, Mp), lambda c, b: (b, 0, 0)),
                pl.BlockSpec((Ci, tco, Mp), lambda c, b: (0, c, 0)),
                pl.BlockSpec((Ci, tco, Mp), lambda c, b: (0, c, 0)),
            ],
            out_specs=(
                pl.BlockSpec((1, tco, Mp), lambda c, b: (b, c, 0)),
                pl.BlockSpec((1, tco, Mp), lambda c, b: (b, c, 0)),
            ),
            compiler_params=pltpu.CompilerParams(
                dimension_semantics=("parallel", "parallel"),
                vmem_limit_bytes=vmem_limit),
        )
    else:
        # Large Ci: chunk the contraction over an innermost "arbitrary" axis.
        grid = (Co // tco, B, Ci // tci)
        call = pl.pallas_call(
            _mix_kernel_kchunk,
            out_shape=out_shape,
            grid=grid,
            in_specs=[
                pl.BlockSpec((1, tci, Mp), lambda c, b, k: (b, k, 0)),
                pl.BlockSpec((1, tci, Mp), lambda c, b, k: (b, k, 0)),
                pl.BlockSpec((tci, tco, Mp), lambda c, b, k: (k, c, 0)),
                pl.BlockSpec((tci, tco, Mp), lambda c, b, k: (k, c, 0)),
            ],
            out_specs=(
                pl.BlockSpec((1, tco, Mp), lambda c, b, k: (b, c, 0)),
                pl.BlockSpec((1, tco, Mp), lambda c, b, k: (b, c, 0)),
            ),
            scratch_shapes=[pltpu.VMEM((tco, Mp), jnp.float32),
                            pltpu.VMEM((tco, Mp), jnp.float32)],
            compiler_params=pltpu.CompilerParams(
                dimension_semantics=("parallel", "parallel", "arbitrary"),
                vmem_limit_bytes=vmem_limit),
        )

    out_r, out_i = call(xr, xi, wr_p, wi_p)
    return out_r[:, :, :M], out_i[:, :, :M]


def prepare_spectral_weights(weights1, weights2, am1, am2, dtype=jnp.float32):
    """Slice both weight regions, fuse them along the flattened mode (lane)
    axis, split re/im and lane-pad to a multiple of 128.

    Depends only on the parameters: compute once and cache across forward
    calls in a real training/inference loop.  Returns (wr, wi): (Ci, Co, Mp).
    """
    w = jnp.stack([weights1[:, :, :am1, :am2],
                   weights2[:, :, :am1, :am2]], axis=2)       # (Ci, Co, 2, am1, am2)
    Ci, Co = w.shape[0], w.shape[1]
    M = 2 * am1 * am2
    w = w.reshape(Ci, Co, M)
    Mp = pl.cdiv(M, 128) * 128
    wr = jnp.real(w).astype(dtype)
    wi = jnp.imag(w).astype(dtype)
    if Mp != M:
        pad = ((0, 0), (0, 0), (0, Mp - M))
        wr = jnp.pad(wr, pad)
        wi = jnp.pad(wi, pad)
    return wr, wi


# ---------------------------------------------------------------------------
# FourierLayer forward
# ---------------------------------------------------------------------------

def fourier_layer(x, weights1, weights2, modes1, modes2,
                  compute_dtype=jnp.float32):
    """Forward pass of FourierLayer.  x: (B, C, H, W) float32 (NCHW).

    compute_dtype selects the operand storage dtype fed to the Pallas kernel
    (float32 or bfloat16); accumulation is always float32 inside the kernel.
    """
    Ci, Co = weights1.shape[0], weights1.shape[1]
    assert Ci == Co, "FourierLayer requires in_channels == out_channels"

    residual = x
    # TODO(synk): rfft2/irfft2 have no Pallas primitive; computed with jnp.fft outside the kernel.
    x_ft = jnp.fft.rfft2(x)                                   # (B, Ci, H, W//2+1) complex64
    B, C, h, w = x_ft.shape
    # Mirrors the PyTorch module exactly, including its quirk of taking
    # `w // 2 + 1` of the *rfft* width for out_ft / available_modes2.
    wf2 = w // 2 + 1
    am1 = min(modes1, h)
    am2 = min(modes2, wf2)

    # Fuse both frequency row-regions along the flattened mode (lane) axis ->
    # one pallas_call covers both einsums.
    x_regions = jnp.stack([x_ft[:, :, :am1, :am2],
                           x_ft[:, :, h - am1:, :am2]], axis=2)   # (B, Ci, 2, am1, am2)
    M = 2 * am1 * am2
    x_regions = x_regions.reshape(B, C, M)
    xr = jnp.real(x_regions).astype(compute_dtype)
    xi = jnp.imag(x_regions).astype(compute_dtype)

    wr, wi = prepare_spectral_weights(weights1, weights2, am1, am2,
                                      dtype=compute_dtype)

    out_r, out_i = spectral_channel_mix(xr, xi, wr, wi)

    out = (out_r + 1j * out_i).astype(jnp.complex64).reshape(B, Co, 2, am1, am2)
    r1, r2 = out[:, :, 0], out[:, :, 1]

    # Assemble out_ft with contiguous concat/pad; preserve torch's overwrite
    # order (region 2 wins) if the two row regions overlap.
    if 2 * am1 <= h:
        gap = jnp.zeros((B, Co, h - 2 * am1, am2), jnp.complex64)
        rows = jnp.concatenate([r1, gap, r2], axis=2)             # (B, Co, h, am2)
    else:
        rows = jnp.zeros((B, Co, h, am2), jnp.complex64)
        rows = rows.at[:, :, :am1, :].set(r1)
        rows = rows.at[:, :, h - am1:, :].set(r2)
    out_ft = jnp.pad(rows, ((0, 0), (0, 0), (0, 0), (0, wf2 - am2)))

    x_out = jnp.fft.irfft2(out_ft, s=(x.shape[-2], x.shape[-1]))  # (B, Co, H, W)
    return x_out + residual


def fourier_layer_reference(x, weights1, weights2, modes1, modes2):
    """Pure-JAX reference (no Pallas), mirroring the PyTorch module."""
    Ci, Co = weights1.shape[0], weights1.shape[1]
    assert Ci == Co
    x_ft = jnp.fft.rfft2(x)
    B, C, h, w = x_ft.shape
    wf2 = w // 2 + 1
    am1 = min(modes1, h)
    am2 = min(modes2, wf2)
    r1 = jnp.einsum('bixy,ioxy->boxy',
                    x_ft[:, :, :am1, :am2], weights1[:, :, :am1, :am2])
    r2 = jnp.einsum('bixy,ioxy->boxy',
                    x_ft[:, :, h - am1:, :am2], weights2[:, :, :am1, :am2])
    out_ft = jnp.zeros((B, Co, h, wf2), dtype=jnp.complex64)
    out_ft = out_ft.at[:, :, :am1, :am2].set(r1)
    out_ft = out_ft.at[:, :, h - am1:, :am2].set(r2)
    return jnp.fft.irfft2(out_ft, s=(x.shape[-2], x.shape[-1])) + x


if __name__ == "__main__":
    B, C, H, W = 2, 4, 16, 16
    modes1, modes2 = 4, 4

    key = jax.random.PRNGKey(0)
    kx, kw1r, kw1i, kw2r, kw2i = jax.random.split(key, 5)

    x = jax.random.normal(kx, (B, C, H, W), dtype=jnp.float32)

    scale = 1.0 / (C * C)
    weights1 = (scale * (jax.random.normal(kw1r, (C, C, modes1, modes2), jnp.float32)
                         + 1j * jax.random.normal(kw1i, (C, C, modes1, modes2), jnp.float32))
                ).astype(jnp.complex64)
    weights2 = (scale * (jax.random.normal(kw2r, (C, C, modes1, modes2), jnp.float32)
                         + 1j * jax.random.normal(kw2i, (C, C, modes1, modes2), jnp.float32))
                ).astype(jnp.complex64)

    # f32 operand path: strict check against the pure-JAX reference.
    run = jax.jit(functools.partial(fourier_layer, modes1=modes1, modes2=modes2))
    out = jax.block_until_ready(run(x, weights1, weights2))

    ref = jax.block_until_ready(
        fourier_layer_reference(x, weights1, weights2, modes1, modes2))

    assert out.shape == (B, C, H, W) and out.dtype == jnp.float32
    assert jnp.allclose(out, ref, rtol=1e-3, atol=1e-3), "mismatch vs reference (f32)"

    # bf16-storage path (halved HBM/VMEM traffic; f32 accumulation in-kernel):
    # looser tolerance because operands are rounded to bf16.
    run_bf16 = jax.jit(functools.partial(fourier_layer, modes1=modes1, modes2=modes2,
                                         compute_dtype=jnp.bfloat16))
    out_bf16 = jax.block_until_ready(run_bf16(x, weights1, weights2))
    assert jnp.allclose(out_bf16, ref, rtol=5e-2, atol=5e-2), "mismatch vs reference (bf16)"

    print("KERNEL_OK")
</pallas_src>

<mosaic_0001>
module attributes {stable_mosaic.version = 11 : i64} {
  func.func @_mix_kernel(%arg0: i32, %arg1: i32, %arg2: memref<1x4x128xf32, #tpu.memory_space<vmem>>, %arg3: memref<1x4x128xf32, #tpu.memory_space<vmem>>, %arg4: memref<4x4x128xf32, #tpu.memory_space<vmem>>, %arg5: memref<4x4x128xf32, #tpu.memory_space<vmem>>, %arg6: memref<1x4x128xf32, #tpu.memory_space<vmem>>, %arg7: memref<1x4x128xf32, #tpu.memory_space<vmem>>) attributes {dimension_semantics = [#tpu.dimension_semantics<parallel>, #tpu.dimension_semantics<parallel>], iteration_bounds = array<i64: 1, 2>, scalar_prefetch = 0 : i64, scratch_operands = 0 : i64, tpu.core_type = #tpu.core_type<tc>, window_params = [{transform_indices = @transform_0, window_bounds = array<i64: 1, 4, 128>}, {transform_indices = @transform_1, window_bounds = array<i64: 1, 4, 128>}, {transform_indices = @transform_2, window_bounds = array<i64: 4, 4, 128>}, {transform_indices = @transform_3, window_bounds = array<i64: 4, 4, 128>}, {transform_indices = @transform_4, window_bounds = array<i64: 1, 4, 128>}, {transform_indices = @transform_5, window_bounds = array<i64: 1, 4, 128>}]} {
    %cst = arith.constant 0.000000e+00 : f32
    %0 = vector.broadcast %cst : f32 to vector<4x128xf32>
    %c0_i32 = arith.constant 0 : i32
    %c0 = arith.constant 0 : index
    %1 = arith.index_cast %c0_i32 : i32 to index
    %c0_0 = arith.constant 0 : index
    %2 = vector.load %arg2[%c0, %1, %c0_0] : memref<1x4x128xf32, #tpu.memory_space<vmem>>, vector<1x1x128xf32>
    %3 = vector.shape_cast %2 : vector<1x1x128xf32> to vector<1x128xf32>
    %c0_1 = arith.constant 0 : index
    %4 = arith.index_cast %c0_i32 : i32 to index
    %c0_2 = arith.constant 0 : index
    %5 = vector.load %arg3[%c0_1, %4, %c0_2] : memref<1x4x128xf32, #tpu.memory_space<vmem>>, vector<1x1x128xf32>
    %6 = vector.shape_cast %5 : vector<1x1x128xf32> to vector<1x128xf32>
    %7 = arith.index_cast %c0_i32 : i32 to index
    %c0_3 = arith.constant 0 : index
    %c0_4 = arith.constant 0 : index
    %8 = vector.load %arg4[%7, %c0_3, %c0_4] : memref<4x4x128xf32, #tpu.memory_space<vmem>>, vector<1x4x128xf32>
    %9 = vector.shape_cast %8 : vector<1x4x128xf32> to vector<4x128xf32>
    %10 = arith.index_cast %c0_i32 : i32 to index
    %c0_5 = arith.constant 0 : index
    %c0_6 = arith.constant 0 : index
    %11 = vector.load %arg5[%10, %c0_5, %c0_6] : memref<4x4x128xf32, #tpu.memory_space<vmem>>, vector<1x4x128xf32>
    %12 = vector.shape_cast %11 : vector<1x4x128xf32> to vector<4x128xf32>
    %13 = vector.broadcast %3 : vector<1x128xf32> to vector<4x128xf32>
    %14 = arith.mulf %13, %9 : vector<4x128xf32>
    %15 = vector.broadcast %6 : vector<1x128xf32> to vector<4x128xf32>
    %16 = arith.mulf %15, %12 : vector<4x128xf32>
    %17 = arith.subf %14, %16 : vector<4x128xf32>
    %18 = arith.addf %0, %17 : vector<4x128xf32>
    %19 = vector.broadcast %3 : vector<1x128xf32> to vector<4x128xf32>
    %20 = arith.mulf %19, %12 : vector<4x128xf32>
    %21 = vector.broadcast %6 : vector<1x128xf32> to vector<4x128xf32>
    %22 = arith.mulf %21, %9 : vector<4x128xf32>
    %23 = arith.addf %20, %22 : vector<4x128xf32>
    %24 = arith.addf %0, %23 : vector<4x128xf32>
    %c1_i32 = arith.constant 1 : i32
    %c0_7 = arith.constant 0 : index
    %25 = arith.index_cast %c1_i32 : i32 to index
    %c0_8 = arith.constant 0 : index
    %26 = vector.load %arg2[%c0_7, %25, %c0_8] : memref<1x4x128xf32, #tpu.memory_space<vmem>>, vector<1x1x128xf32>
    %27 = vector.shape_cast %26 : vector<1x1x128xf32> to vector<1x128xf32>
    %c0_9 = arith.constant 0 : index
    %28 = arith.index_cast %c1_i32 : i32 to index
    %c0_10 = arith.constant 0 : index
    %29 = vector.load %arg3[%c0_9, %28, %c0_10] : memref<1x4x128xf32, #tpu.memory_space<vmem>>, vector<1x1x128xf32>
    %30 = vector.shape_cast %29 : vector<1x1x128xf32> to vector<1x128xf32>
    %31 = arith.index_cast %c1_i32 : i32 to index
    %c0_11 = arith.constant 0 : index
    %c0_12 = arith.constant 0 : index
    %32 = vector.load %arg4[%31, %c0_11, %c0_12] : memref<4x4x128xf32, #tpu.memory_space<vmem>>, vector<1x4x128xf32>
    %33 = vector.shape_cast %32 : vector<1x4x128xf32> to vector<4x128xf32>
    %34 = arith.index_cast %c1_i32 : i32 to index
    %c0_13 = arith.constant 0 : index
    %c0_14 = arith.constant 0 : index
    %35 = vector.load %arg5[%34, %c0_13, %c0_14] : memref<4x4x128xf32, #tpu.memory_space<vmem>>, vector<1x4x128xf32>
    %36 = vector.shape_cast %35 : vector<1x4x128xf32> to vector<4x128xf32>
    %37 = vector.broadcast %27 : vector<1x128xf32> to vector<4x128xf32>
    %38 = arith.mulf %37, %33 : vector<4x128xf32>
    %39 = vector.broadcast %30 : vector<1x128xf32> to vector<4x128xf32>
    %40 = arith.mulf %39, %36 : vector<4x128xf32>
    %41 = arith.subf %38, %40 : vector<4x128xf32>
    %42 = arith.addf %18, %41 : vector<4x128xf32>
    %43 = vector.broadcast %27 : vector<1x128xf32> to vector<4x128xf32>
    %44 = arith.mulf %43, %36 : vector<4x128xf32>
    %45 = vector.broadcast %30 : vector<1x128xf32> to vector<4x128xf32>
    %46 = arith.mulf %45, %33 : vector<4x128xf32>
    %47 = arith.addf %44, %46 : vector<4x128xf32>
    %48 = arith.addf %24, %47 : vector<4x128xf32>
    %c2_i32 = arith.constant 2 : i32
    %c0_15 = arith.constant 0 : index
    %49 = arith.index_cast %c2_i32 : i32 to index
    %c0_16 = arith.constant 0 : index
    %50 = vector.load %arg2[%c0_15, %49, %c0_16] : memref<1x4x128xf32, #tpu.memory_space<vmem>>, vector<1x1x128xf32>
    %51 = vector.shape_cast %50 : vector<1x1x128xf32> to vector<1x128xf32>
    %c0_17 = arith.constant 0 : index
    %52 = arith.index_cast %c2_i32 : i32 to index
    %c0_18 = arith.constant 0 : index
    %53 = vector.load %arg3[%c0_17, %52, %c0_18] : memref<1x4x128xf32, #tpu.memory_space<vmem>>, vector<1x1x128xf32>
    %54 = vector.shape_cast %53 : vector<1x1x128xf32> to vector<1x128xf32>
    %55 = arith.index_cast %c2_i32 : i32 to index
    %c0_19 = arith.constant 0 : index
    %c0_20 = arith.constant 0 : index
    %56 = vector.load %arg4[%55, %c0_19, %c0_20] : memref<4x4x128xf32, #tpu.memory_space<vmem>>, vector<1x4x128xf32>
    %57 = vector.shape_cast %56 : vector<1x4x128xf32> to vector<4x128xf32>
    %58 = arith.index_cast %c2_i32 : i32 to index
    %c0_21 = arith.constant 0 : index
    %c0_22 = arith.constant 0 : index
    %59 = vector.load %arg5[%58, %c0_21, %c0_22] : memref<4x4x128xf32, #tpu.memory_space<vmem>>, vector<1x4x128xf32>
    %60 = vector.shape_cast %59 : vector<1x4x128xf32> to vector<4x128xf32>
    %61 = vector.broadcast %51 : vector<1x128xf32> to vector<4x128xf32>
    %62 = arith.mulf %61, %57 : vector<4x128xf32>
    %63 = vector.broadcast %54 : vector<1x128xf32> to vector<4x128xf32>
    %64 = arith.mulf %63, %60 : vector<4x128xf32>
    %65 = arith.subf %62, %64 : vector<4x128xf32>
    %66 = arith.addf %42, %65 : vector<4x128xf32>
    %67 = vector.broadcast %51 : vector<1x128xf32> to vector<4x128xf32>
    %68 = arith.mulf %67, %60 : vector<4x128xf32>
    %69 = vector.broadcast %54 : vector<1x128xf32> to vector<4x128xf32>
    %70 = arith.mulf %69, %57 : vector<4x128xf32>
    %71 = arith.addf %68, %70 : vector<4x128xf32>
    %72 = arith.addf %48, %71 : vector<4x128xf32>
    %c3_i32 = arith.constant 3 : i32
    %c0_23 = arith.constant 0 : index
    %73 = arith.index_cast %c3_i32 : i32 to index
    %c0_24 = arith.constant 0 : index
    %74 = vector.load %arg2[%c0_23, %73, %c0_24] : memref<1x4x128xf32, #tpu.memory_space<vmem>>, vector<1x1x128xf32>
    %75 = vector.shape_cast %74 : vector<1x1x128xf32> to vector<1x128xf32>
    %c0_25 = arith.constant 0 : index
    %76 = arith.index_cast %c3_i32 : i32 to index
    %c0_26 = arith.constant 0 : index
    %77 = vector.load %arg3[%c0_25, %76, %c0_26] : memref<1x4x128xf32, #tpu.memory_space<vmem>>, vector<1x1x128xf32>
    %78 = vector.shape_cast %77 : vector<1x1x128xf32> to vector<1x128xf32>
    %79 = arith.index_cast %c3_i32 : i32 to index
    %c0_27 = arith.constant 0 : index
    %c0_28 = arith.constant 0 : index
    %80 = vector.load %arg4[%79, %c0_27, %c0_28] : memref<4x4x128xf32, #tpu.memory_space<vmem>>, vector<1x4x128xf32>
    %81 = vector.shape_cast %80 : vector<1x4x128xf32> to vector<4x128xf32>
    %82 = arith.index_cast %c3_i32 : i32 to index
    %c0_29 = arith.constant 0 : index
    %c0_30 = arith.constant 0 : index
    %83 = vector.load %arg5[%82, %c0_29, %c0_30] : memref<4x4x128xf32, #tpu.memory_space<vmem>>, vector<1x4x128xf32>
    %84 = vector.shape_cast %83 : vector<1x4x128xf32> to vector<4x128xf32>
    %85 = vector.broadcast %75 : vector<1x128xf32> to vector<4x128xf32>
    %86 = arith.mulf %85, %81 : vector<4x128xf32>
    %87 = vector.broadcast %78 : vector<1x128xf32> to vector<4x128xf32>
    %88 = arith.mulf %87, %84 : vector<4x128xf32>
    %89 = arith.subf %86, %88 : vector<4x128xf32>
    %90 = arith.addf %66, %89 : vector<4x128xf32>
    %91 = vector.broadcast %75 : vector<1x128xf32> to vector<4x128xf32>
    %92 = arith.mulf %91, %84 : vector<4x128xf32>
    %93 = vector.broadcast %78 : vector<1x128xf32> to vector<4x128xf32>
    %94 = arith.mulf %93, %81 : vector<4x128xf32>
    %95 = arith.addf %92, %94 : vector<4x128xf32>
    %96 = arith.addf %72, %95 : vector<4x128xf32>
    %c4_i32 = arith.constant 4 : i32
    %c0_31 = arith.constant 0 : index
    %c0_32 = arith.constant 0 : index
    %c0_33 = arith.constant 0 : index
    %97 = vector.load %arg6[%c0_31, %c0_32, %c0_33] : memref<1x4x128xf32, #tpu.memory_space<vmem>>, vector<1x4x128xf32>
    %98 = vector.shape_cast %97 : vector<1x4x128xf32> to vector<4x128xf32>
    %99 = vector.shape_cast %90 : vector<4x128xf32> to vector<1x4x128xf32>
    tpu.vector_store %arg6[%c0_31, %c0_32, %c0_33], %99 {strides = array<i32>} : memref<1x4x128xf32, #tpu.memory_space<vmem>>, vector<1x4x128xf32>,
    %c0_34 = arith.constant 0 : index
    %c0_35 = arith.constant 0 : index
    %c0_36 = arith.constant 0 : index
    %100 = vector.load %arg7[%c0_34, %c0_35, %c0_36] : memref<1x4x128xf32, #tpu.memory_space<vmem>>, vector<1x4x128xf32>
    %101 = vector.shape_cast %100 : vector<1x4x128xf32> to vector<4x128xf32>
    %102 = vector.shape_cast %96 : vector<4x128xf32> to vector<1x4x128xf32>
    tpu.vector_store %arg7[%c0_34, %c0_35, %c0_36], %102 {strides = array<i32>} : memref<1x4x128xf32, #tpu.memory_space<vmem>>, vector<1x4x128xf32>,
    return
  }
  func.func @transform_0(%arg0: i32, %arg1: i32) -> (i32, i32, i32) {
    %c0_i32 = arith.constant 0 : i32
    %c0_i32_0 = arith.constant 0 : i32
    %c0_i32_1 = arith.constant 0 : i32
    return %arg1, %c0_i32, %c0_i32_0 : i32, i32, i32
  }
  func.func @transform_1(%arg0: i32, %arg1: i32) -> (i32, i32, i32) {
    %c0_i32 = arith.constant 0 : i32
    %c0_i32_0 = arith.constant 0 : i32
    %c0_i32_1 = arith.constant 0 : i32
    return %arg1, %c0_i32, %c0_i32_0 : i32, i32, i32
  }
  func.func @transform_2(%arg0: i32, %arg1: i32) -> (i32, i32, i32) {
    %c0_i32 = arith.constant 0 : i32
    %c0_i32_0 = arith.constant 0 : i32
    %c0_i32_1 = arith.constant 0 : i32
    return %c0_i32, %arg0, %c0_i32_0 : i32, i32, i32
  }
  func.func @transform_3(%arg0: i32, %arg1: i32) -> (i32, i32, i32) {
    %c0_i32 = arith.constant 0 : i32
    %c0_i32_0 = arith.constant 0 : i32
    %c0_i32_1 = arith.constant 0 : i32
    return %c0_i32, %arg0, %c0_i32_0 : i32, i32, i32
  }
  func.func @transform_4(%arg0: i32, %arg1: i32) -> (i32, i32, i32) {
    %c0_i32 = arith.constant 0 : i32
    %c0_i32_0 = arith.constant 0 : i32
    return %arg1, %arg0, %c0_i32 : i32, i32, i32
  }
  func.func @transform_5(%arg0: i32, %arg1: i32) -> (i32, i32, i32) {
    %c0_i32 = arith.constant 0 : i32
    %c0_i32_0 = arith.constant 0 : i32
    return %arg1, %arg0, %c0_i32 : i32, i32, i32
  }
}

</mosaic_0001>

<llo_original>
// kernel: custom-call
$region0: #{custom-call}
  %s0 = inlined_call_operand.hbm [shape: c64[4,4,4,4], index: 0, kind: input, shape index: {}]
  %s1 = inlined_call_operand.vmem [shape: f32[4,4,4,4], index: 1, kind: output, shape index: {}]
  $region1: #{custom-call} parent=0
    #allocation0 [shape = 's32[1]{0}', space=sflag, size = 0x4, scoped, tag = 'scoped memory for custom-call']
    %2 = vsyncpa [#allocation0], 0
    %s3 = sshll.u32 %s1, 4
    %s4 = int_to_ptr.vmem [resolvable:$true] %s3
    %6 = dma.hbm_to_vmem [thread:$0]  %s0, 1024, %s4, [#allocation0]
    %7 = dma.done [#allocation0], 1024
    %8 = vsyncpa [#allocation0], 1

// kernel: custom-call.1
$region0: #{custom-call.1}
  %s0 = inlined_call_operand.hbm [shape: c64[4,4,4,4], index: 0, kind: input, shape index: {}]
  %s1 = inlined_call_operand.vmem [shape: f32[4,4,4,4], index: 1, kind: output, shape index: {}]
  %s2 = scalar_lea.hbm %s0, 1024
  $region1: #{custom-call.1} parent=0
    #allocation0 [shape = 's32[1]{0}', space=sflag, size = 0x4, scoped, tag = 'scoped memory for custom-call.1']
    %3 = vsyncpa [#allocation0], 0
    %s4 = sshll.u32 %s1, 4
    %s5 = int_to_ptr.vmem [resolvable:$true] %s4
    %7 = dma.hbm_to_vmem [thread:$0]  %s2, 1024, %s5, [#allocation0]
    %8 = dma.done [#allocation0], 1024
    %9 = vsyncpa [#allocation0], 1

// kernel: reverse.0
$region0: #{reverse.0}
  %s0 = inlined_call_operand.vmem [shape: f32[2,4,16,7], index: 0, kind: input, shape index: {}]
  %s1 = inlined_call_operand.vmem [shape: f32[2,4,16,7], index: 1, kind: output, shape index: {}]
  $region1: #{reverse.0} parent=0
    #allocation0 [shape = 'u8[65536]{0}', space=vmem, size = 0x10000, scoped, tag = 'operand span for operand 0']
    #allocation1 [shape = 'u8[32768]{0}', space=vmem, size = 0x8000, scoped, tag = 'operand span for operand 1']
    %s2 = scalar_lea.vmem [#allocation0], 8
    // Predicated region
    $region2: #{reverse.0} parent=1 // pred_check
      _
    $region3: #{reverse.0} parent=1 // pred_check_branch
      %4 = sbr.rel (0) target = $region5
    $region4: #{reverse.0} parent=1 // pred_region
      // Predicated region
      $region6: #{reverse.0} parent=4 // pred_check
        _
      $region7: #{reverse.0} parent=4 // pred_check_branch
        %6 = sbr.rel (0) target = $region9
      $region8: #{reverse.0} parent=4 // pred_region
        // Predicated region
        $region21: #{reverse.0} parent=8 // pred_check
          _
        $region22: #{reverse.0} parent=8 // pred_check_branch
          %36 = sbr.rel (0) target = $region24
        $region23: #{reverse.0} parent=8 // pred_region
          loop: start=0, step=1, limit=1
          $region25: #{reverse.0} parent=23 // loop_pre_header
            _
          $region26: #{reverse.0} parent=23 // loop_header
            %s38 = sphi 0, %s42
            %p39 = scmp.ge.s32.totalorder %s38, 1
            %s43 = sphi %s0, %s0
            %s44 = sphi %s2, %s2
          $region27: #{reverse.0} parent=23 // loop_header_branch
            %41 = sbr.rel (%p39) target = $region31
          $region28: #{reverse.0} parent=23 // loop_body
            %v45 = vld [vmem:[%s43] sm:$0xff]
            %46 = vst [vmem:[%s44] sm:$0xff] %v45
            %v47 = vld [vmem:[%s43 + $0x8] sm:$0xff]
            %48 = vst [vmem:[%s44 + $0x10] sm:$0xff] %v47
            %v49 = vld [vmem:[%s43 + $0x10] sm:$0xff]
            %50 = vst [vmem:[%s44 + $0x20] sm:$0xff] %v49
            %v51 = vld [vmem:[%s43 + $0x18] sm:$0xff]
            %52 = vst [vmem:[%s44 + $0x30] sm:$0xff] %v51
            %v53 = vld [vmem:[%s43 + $0x20] sm:$0xff]
            %54 = vst [vmem:[%s44 + $0x40] sm:$0xff] %v53
            %v55 = vld [vmem:[%s43 + $0x28] sm:$0xff]
            %56 = vst [vmem:[%s44 + $0x50] sm:$0xff] %v55
            %v57 = vld [vmem:[%s43 + $0x30] sm:$0xff]
            %58 = vst [vmem:[%s44 + $0x60] sm:$0xff] %v57
            %v59 = vld [vmem:[%s43 + $0x38] sm:$0xff]
            %60 = vst [vmem:[%s44 + $0x70] sm:$0xff] %v59
          $region29: #{reverse.0} parent=23 // loop_footer
            %s42 = sadd.s32 1, %s38
          $region30: #{reverse.0} parent=23 // loop_footer_branch
            %37 = sbr.rel target = $region26
          $region31: #{reverse.0} parent=23 // loop_exit
            _
        $region24: #{reverse.0} parent=8 // pred_fallthru
          _
        // Predicated region
        $region32: #{reverse.0} parent=8 // pred_check
          _
        $region33: #{reverse.0} parent=8 // pred_check_branch
          %62 = sbr.rel target = $region35
        $region34: #{reverse.0} parent=8 // pred_region
          _
        $region35: #{reverse.0} parent=8 // pred_fallthru
          _
      $region9: #{reverse.0} parent=4 // pred_fallthru
        _
      // Predicated region
      $region10: #{reverse.0} parent=4 // pred_check
        _
      $region11: #{reverse.0} parent=4 // pred_check_branch
        %8 = sbr.rel target = $region13
      $region12: #{reverse.0} parent=4 // pred_region
        %s10 = ssub.s32 256, 1
        loop: start=0, step=1, limit=1
        $region14: #{reverse.0} parent=12 // loop_pre_header
          _
        $region15: #{reverse.0} parent=12 // loop_header
          %s12 = sphi 0, %s16
          %p13 = scmp.ge.s32.totalorder %s12, 1
          %s17 = sphi %s0, %s0
          %s18 = sphi %s2, %s2
        $region16: #{reverse.0} parent=12 // loop_header_branch
          %15 = sbr.rel (%p13) target = $region20
        $region17: #{reverse.0} parent=12 // loop_body
          %v19 = vld [vmem:[%s17] sm:%s10]
          %20 = vst [vmem:[%s18] sm:%s10] %v19
          %v21 = vld [vmem:[%s17 + $0x8] sm:%s10]
          %22 = vst [vmem:[%s18 + $0x10] sm:%s10] %v21
          %v23 = vld [vmem:[%s17 + $0x10] sm:%s10]
          %24 = vst [vmem:[%s18 + $0x20] sm:%s10] %v23
          %v25 = vld [vmem:[%s17 + $0x18] sm:%s10]
          %26 = vst [vmem:[%s18 + $0x30] sm:%s10] %v25
          %v27 = vld [vmem:[%s17 + $0x20] sm:%s10]
          %28 = vst [vmem:[%s18 + $0x40] sm:%s10] %v27
          %v29 = vld [vmem:[%s17 + $0x28] sm:%s10]
          %30 = vst [vmem:[%s18 + $0x50] sm:%s10] %v29
          %v31 = vld [vmem:[%s17 + $0x30] sm:%s10]
          %32 = vst [vmem:[%s18 + $0x60] sm:%s10] %v31
          %v33 = vld [vmem:[%s17 + $0x38] sm:%s10]
          %34 = vst [vmem:[%s18 + $0x70] sm:%s10] %v33
        $region18: #{reverse.0} parent=12 // loop_footer
          %s16 = sadd.s32 1, %s12
        $region19: #{reverse.0} parent=12 // loop_footer_branch
          %11 = sbr.rel target = $region15
        $region20: #{reverse.0} parent=12 // loop_exit
          _
      $region13: #{reverse.0} parent=4 // pred_fallthru
        _
    $region5: #{reverse.0} parent=1 // pred_fallthru
      _
    %63 = vnop
    %s64 = scalar_lea.vmem [#allocation0], 7
    %v65 = vld [vmem:[%s64] ss:$-1 sm:$0xff]
    %v66 = vrot.slane %v65, 1
    %67 = vst [vmem:[#allocation1] sm:$0xff] %v66
    %s68 = scalar_lea.vmem [#allocation0], 8
    %s69 = scalar_lea.vmem %s68, 7 [#allocation0]
    %v70 = vld [vmem:[%s69] ss:$-1 sm:$0xff]
    %v71 = vrot.slane %v70, 1
    %v72 = vlaneseq
    %v73 = vshrl.u32 %v72, 7
    %vm74 = vcmp.lt.s32.totalorder %v73, 7
    %75 = vst.msk [vmem:[#allocation1] sm:$0xff] %vm74, %v71
    %s76 = scalar_lea.vmem [#allocation1], 8
    %s77 = scalar_lea.vmem [#allocation0], 16
    %s78 = scalar_lea.vmem %s77, 7 [#allocation0]
    %v79 = vld [vmem:[%s78] ss:$-1 sm:$0xff]
    %v80 = vrot.slane %v79, 1
    %81 = vst [vmem:[%s76] sm:$0xff] %v80
    %s82 = scalar_lea.vmem %s77, 8 [#allocation0]
    %s83 = scalar_lea.vmem %s82, 7 [#allocation0]
    %v84 = vld [vmem:[%s83] ss:$-1 sm:$0xff]
    %v85 = vrot.slane %v84, 1
    %v86 = vlaneseq
    %v87 = vshrl.u32 %v86, 7
    %vm88 = vcmp.lt.s32.totalorder %v87, 7
    %89 = vst.msk [vmem:[%s76] sm:$0xff] %vm88, %v85
    %s90 = scalar_lea.vmem [#allocation1], 16
    %s91 = scalar_lea.vmem [#allocation0], 32
    %s92 = scalar_lea.vmem %s91, 7 [#allocation0]
    %v93 = vld [vmem:[%s92] ss:$-1 sm:$0xff]
    %v94 = vrot.slane %v93, 1
    %95 = vst [vmem:[%s90] sm:$0xff] %v94
    %s96 = scalar_lea.vmem %s91, 8 [#allocation0]
    %s97 = scalar_lea.vmem %s96, 7 [#allocation0]
    %v98 = vld [vmem:[%s97] ss:$-1 sm:$0xff]
    %v99 = vrot.slane %v98, 1
    %v100 = vlaneseq
    %v101 = vshrl.u32 %v100, 7
    %vm102 = vcmp.lt.s32.totalorder %v101, 7
    %103 = vst.msk [vmem:[%s90] sm:$0xff] %vm102, %v99
    %s104 = scalar_lea.vmem [#allocation1], 24
    %s105 = scalar_lea.vmem [#allocation0], 48
    %s106 = scalar_lea.vmem %s105, 7 [#allocation0]
    %v107 = vld [vmem:[%s106] ss:$-1 sm:$0xff]
    %v108 = vrot.slane %v107, 1
    %109 = vst [vmem:[%s104] sm:$0xff] %v108
    %s110 = scalar_lea.vmem %s105, 8 [#allocation0]
    %s111 = scalar_lea.vmem %s110, 7 [#allocation0]
    %v112 = vld [vmem:[%s111] ss:$-1 sm:$0xff]
    %v113 = vrot.slane %v112, 1
    %v114 = vlaneseq
    %v115 = vshrl.u32 %v114, 7
    %vm116 = vcmp.lt.s32.totalorder %v115, 7
    %117 = vst.msk [vmem:[%s104] sm:$0xff] %vm116, %v113
    %s118 = scalar_lea.vmem [#allocation1], 32
    %s119 = scalar_lea.vmem [#allocation0], 64
    %s120 = scalar_lea.vmem %s119, 7 [#allocation0]
    %v121 = vld [vmem:[%s120] ss:$-1 sm:$0xff]
    %v122 = vrot.slane %v121, 1
    %123 = vst [vmem:[%s118] sm:$0xff] %v122
    %s124 = scalar_lea.vmem %s119, 8 [#allocation0]
    %s125 = scalar_lea.vmem %s124, 7 [#allocation0]
    %v126 = vld [vmem:[%s125] ss:$-1 sm:$0xff]
    %v127 = vrot.slane %v126, 1
    %v128 = vlaneseq
    %v129 = vshrl.u32 %v128, 7
    %vm130 = vcmp.lt.s32.totalorder %v129, 7
    %131 = vst.msk [vmem:[%s118] sm:$0xff] %vm130, %v127
    %s132 = scalar_lea.vmem [#allocation1], 40
    %s133 = scalar_lea.vmem [#allocation0], 80
    %s134 = scalar_lea.vmem %s133, 7 [#allocation0]
    %v135 = vld [vmem:[%s134] ss:$-1 sm:$0xff]
    %v136 = vrot.slane %v135, 1
    %137 = vst [vmem:[%s132] sm:$0xff] %v136
    %s138 = scalar_lea.vmem %s133, 8 [#allocation0]
    %s139 = scalar_lea.vmem %s138, 7 [#allocation0]
    %v140 = vld [vmem:[%s139] ss:$-1 sm:$0xff]
    %v141 = vrot.slane %v140, 1
    %v142 = vlaneseq
    %v143 = vshrl.u32 %v142, 7
    %vm144 = vcmp.lt.s32.totalorder %v143, 7
    %145 = vst.msk [vmem:[%s132] sm:$0xff] %vm144, %v141
    %s146 = scalar_lea.vmem [#allocation1], 48
    %s147 = scalar_lea.vmem [#allocation0], 96
    %s148 = scalar_lea.vmem %s147, 7 [#allocation0]
    %v149 = vld [vmem:[%s148] ss:$-1 sm:$0xff]
    %v150 = vrot.slane %v149, 1
    %151 = vst [vmem:[%s146] sm:$0xff] %v150
    %s152 = scalar_lea.vmem %s147, 8 [#allocation0]
    %s153 = scalar_lea.vmem %s152, 7 [#allocation0]
    %v154 = vld [vmem:[%s153] ss:$-1 sm:$0xff]
    %v155 = vrot.slane %v154, 1
    %v156 = vlaneseq
    %v157 = vshrl.u32 %v156, 7
    %vm158 = vcmp.lt.s32.totalorder %v157, 7
    %159 = vst.msk [vmem:[%s146] sm:$0xff] %vm158, %v155
    %s160 = scalar_lea.vmem [#allocation1], 56
    %s161 = scalar_lea.vmem [#allocation0], 112
    %s162 = scalar_lea.vmem %s161, 7 [#allocation0]
    %v163 = vld [vmem:[%s162] ss:$-1 sm:$0xff]
    %v164 = vrot.slane %v163, 1
    %165 = vst [vmem:[%s160] sm:$0xff] %v164
    %s166 = scalar_lea.vmem %s161, 8 [#allocation0]
    %s167 = scalar_lea.vmem %s166, 7 [#allocation0]
    %v168 = vld [vmem:[%s167] ss:$-1 sm:$0xff]
    %v169 = vrot.slane %v168, 1
    %v170 = vlaneseq
    %v171 = vshrl.u32 %v170, 7
    %vm172 = vcmp.lt.s32.totalorder %v171, 7
    %173 = vst.msk [vmem:[%s160] sm:$0xff] %vm172, %v169
    // Predicated region
    $region36: #{reverse.0} parent=1 // pred_check
      _
    $region37: #{reverse.0} parent=1 // pred_check_branch
      %175 = sbr.rel (0) target = $region39
    $region38: #{reverse.0} parent=1 // pred_region
      // Predicated region
      $region40: #{reverse.0} parent=38 // pred_check
        _
      $region41: #{reverse.0} parent=38 // pred_check_branch
        %177 = sbr.rel (0) target = $region43
      $region42: #{reverse.0} parent=38 // pred_region
        // Predicated region
        $region55: #{reverse.0} parent=42 // pred_check
          _
        $region56: #{reverse.0} parent=42 // pred_check_branch
          %207 = sbr.rel (0) target = $region58
        $region57: #{reverse.0} parent=42 // pred_region
          loop: start=0, step=1, limit=1
          $region59: #{reverse.0} parent=57 // loop_pre_header
            _
          $region60: #{reverse.0} parent=57 // loop_header
            %s209 = sphi 0, %s213
            %p210 = scmp.ge.s32.totalorder %s209, 1
            %s214 = sphi [#allocation1], [#allocation1]
            %s215 = sphi %s1, %s1
          $region61: #{reverse.0} parent=57 // loop_header_branch
            %212 = sbr.rel (%p210) target = $region65
          $region62: #{reverse.0} parent=57 // loop_body
            %v216 = vld [vmem:[%s214] sm:$0xff]
            %217 = vst [vmem:[%s215] sm:$0xff] %v216
            %v218 = vld [vmem:[%s214 + $0x8] sm:$0xff]
            %219 = vst [vmem:[%s215 + $0x8] sm:$0xff] %v218
            %v220 = vld [vmem:[%s214 + $0x10] sm:$0xff]
            %221 = vst [vmem:[%s215 + $0x10] sm:$0xff] %v220
            %v222 = vld [vmem:[%s214 + $0x18] sm:$0xff]
            %223 = vst [vmem:[%s215 + $0x18] sm:$0xff] %v222
            %v224 = vld [vmem:[%s214 + $0x20] sm:$0xff]
            %225 = vst [vmem:[%s215 + $0x20] sm:$0xff] %v224
            %v226 = vld [vmem:[%s214 + $0x28] sm:$0xff]
            %227 = vst [vmem:[%s215 + $0x28] sm:$0xff] %v226
            %v228 = vld [vmem:[%s214 + $0x30] sm:$0xff]
            %229 = vst [vmem:[%s215 + $0x30] sm:$0xff] %v228
            %v230 = vld [vmem:[%s214 + $0x38] sm:$0xff]
            %231 = vst [vmem:[%s215 + $0x38] sm:$0xff] %v230
          $region63: #{reverse.0} parent=57 // loop_footer
            %s213 = sadd.s32 1, %s209
          $region64: #{reverse.0} parent=57 // loop_footer_branch
            %208 = sbr.rel target = $region60
          $region65: #{reverse.0} parent=57 // loop_exit
            _
        $region58: #{reverse.0} parent=42 // pred_fallthru
          _
        // Predicated region
        $region66: #{reverse.0} parent=42 // pred_check
          _
        $region67: #{reverse.0} parent=42 // pred_check_branch
          %233 = sbr.rel target = $region69
        $region68: #{reverse.0} parent=42 // pred_region
          _
        $region69: #{reverse.0} parent=42 // pred_fallthru
          _
      $region43: #{reverse.0} parent=38 // pred_fallthru
        _
      // Predicated region
      $region44: #{reverse.0} parent=38 // pred_check
        _
      $region45: #{reverse.0} parent=38 // pred_check_branch
        %179 = sbr.rel target = $region47
      $region46: #{reverse.0} parent=38 // pred_region
        %s181 = ssub.s32 256, 1
        loop: start=0, step=1, limit=1
        $region48: #{reverse.0} parent=46 // loop_pre_header
          _
        $region49: #{reverse.0} parent=46 // loop_header
          %s183 = sphi 0, %s187
          %p184 = scmp.ge.s32.totalorder %s183, 1
          %s188 = sphi [#allocation1], [#allocation1]
          %s189 = sphi %s1, %s1
        $region50: #{reverse.0} parent=46 // loop_header_branch
          %186 = sbr.rel (%p184) target = $region54
        $region51: #{reverse.0} parent=46 // loop_body
          %v190 = vld [vmem:[%s188] sm:%s181]
          %191 = vst [vmem:[%s189] sm:%s181] %v190
          %v192 = vld [vmem:[%s188 + $0x8] sm:%s181]
          %193 = vst [vmem:[%s189 + $0x8] sm:%s181] %v192
          %v194 = vld [vmem:[%s188 + $0x10] sm:%s181]
          %195 = vst [vmem:[%s189 + $0x10] sm:%s181] %v194
          %v196 = vld [vmem:[%s188 + $0x18] sm:%s181]
          %197 = vst [vmem:[%s189 + $0x18] sm:%s181] %v196
          %v198 = vld [vmem:[%s188 + $0x20] sm:%s181]
          %199 = vst [vmem:[%s189 + $0x20] sm:%s181] %v198
          %v200 = vld [vmem:[%s188 + $0x28] sm:%s181]
          %201 = vst [vmem:[%s189 + $0x28] sm:%s181] %v200
          %v202 = vld [vmem:[%s188 + $0x30] sm:%s181]
          %203 = vst [vmem:[%s189 + $0x30] sm:%s181] %v202
          %v204 = vld [vmem:[%s188 + $0x38] sm:%s181]
          %205 = vst [vmem:[%s189 + $0x38] sm:%s181] %v204
        $region52: #{reverse.0} parent=46 // loop_footer
          %s187 = sadd.s32 1, %s183
        $region53: #{reverse.0} parent=46 // loop_footer_branch
          %182 = sbr.rel target = $region49
        $region54: #{reverse.0} parent=46 // loop_exit
          _
      $region47: #{reverse.0} parent=38 // pred_fallthru
        _
    $region39: #{reverse.0} parent=1 // pred_fallthru
      _
    %234 = vnop

// kernel: fourier_layer.1
$region0: #{fourier_layer.1}
  #allocation0 [shape = 'u32[]', space=smem, size = 0x4, offset = 0x4, fixed_abs, tag = 'smem constant byte address 0x4 - core index']
  #allocation1 [shape = 'u32[144,128]{1,0:T(1,128)}', space=vmem, size = 0x12000, scoped, tag = 'internal scratch']
  %s0 = inlined_call_operand.vmem [shape: f32[2,4,128], index: 0, kind: input, shape index: {}]
  %s1 = inlined_call_operand.vmem [shape: f32[2,4,128], index: 1, kind: input, shape index: {}]
  %s2 = inlined_call_operand.vmem [shape: f32[4,4,128], index: 2, kind: input, shape index: {}]
  %s3 = inlined_call_operand.vmem [shape: f32[4,4,128], index: 3, kind: input, shape index: {}]
  %s4 = inlined_call_operand.vmem [shape: f32[2,4,128], index: 4, kind: output, shape index: {0}]
  %s5 = inlined_call_operand.vmem [shape: f32[2,4,128], index: 5, kind: output, shape index: {1}]
  %6 = xla_tuple %s4, %s5
  %s7 = sld [smem:[#allocation0]]
  $region57: #{fourier_layer.1} parent=0
    _
  %s9 = ssub.s32 1, %s7
  %s10 = scalar_select 0, %s9, %s7
  loop: start=0, step=1, limit=4
  $region2: #{fourier_layer.1} parent=0 // loop_pre_header
    _
  $region3: #{fourier_layer.1} parent=0 // loop_header
    %s12 = sphi 0, %s16
    %p13 = scmp.ge.s32.totalorder %s12, 4
    %s19 = sphi 0, %s31
    %s20 = sphi 0, %s27
    %s21 = sphi 0, %s19
    %s22 = sphi 0, %s20
    %s23 = sphi 0, %s21
    %s24 = sphi 0, %s22
    %s34 = sphi 0, %s36
    %s37 = sphi 0, %s34
    %s38 = sphi 0, %s37
    %s54 = sphi 0, %s38
    %s60 = sphi 0, %s62
    %s63 = sphi 0, %s60
    %s64 = sphi 0, %s63
    %s80 = sphi 0, %s64
    %s86 = sphi 0, %s88
    %s89 = sphi 0, %s86
    %s90 = sphi 0, %s89
    %s106 = sphi 0, %s90
    %s112 = sphi 0, %s114
    %s115 = sphi 0, %s112
    %s116 = sphi 0, %s115
    %s132 = sphi 0, %s116
    %s140 = sphi 0, %s142
    %s143 = sphi 0, %s140
    %s144 = sphi 0, %s143
    %s160 = sphi 0, %s144
    %s168 = sphi 0, %s170
    %s171 = sphi 0, %s168
    %s172 = sphi 0, %s171
    %s188 = sphi 0, %s172
  $region4: #{fourier_layer.1} parent=0 // loop_header_branch
    %15 = sbr.rel (%p13) target = $region8
  $region5: #{fourier_layer.1} parent=0 // loop_body
    %s17 = ssub.s32 %s12, 1
    %s18 = ssub.s32 %s12, 2
    %s25 = sadd.s32 1, %s20
    %p26 = scmp.ge.s32.totalorder %s25, 2
    %s27 = scalar_select %p26, 0, %s25
    %s28 = sadd.s32 1, %s19
    %s29 = scalar_select %p26, %s28, %s19
    %p30 = scmp.ge.s32.totalorder %s29, 1
    %s31 = scalar_select %p30, 0, %s29
    %s32 = ssub.s32 %s20, %s27
    %p33 = scmp.eq.s32.totalorder %s32, 0
    %s35 = sadd.s32 %s34, 1
    %s36 = scalar_select %p33, %s34, %s35
    %p39 = pneg %p33
    %p40 = scmp.eq.s32.totalorder %s12, 1
    %p41 = por %p39, %p40
    %p42 = scmp.ne.s32.totalorder %s34, %s37
    %p43 = scmp.eq.s32.totalorder %s12, 0
    %p44 = por %p42, %p43
    %p45 = scmp.ne.s32.totalorder %s34, %s37
    %p46 = scmp.eq.s32.totalorder %s17, 1
    %p47 = por %p45, %p46
    %p48 = scmp.ne.s32.totalorder %s37, %s38
    %p49 = scmp.eq.s32.totalorder %s17, 0
    %p50 = por %p48, %p49
    %p51 = scmp.ne.s32.totalorder %s37, %s38
    %p52 = scmp.eq.s32.totalorder %s18, 1
    %p53 = por %p51, %p52
    %p55 = scmp.ne.s32.totalorder %s38, %s54
    %p56 = scmp.eq.s32.totalorder %s18, 0
    %p57 = por %p55, %p56
    %s58 = ssub.s32 %s20, %s27
    %p59 = scmp.eq.s32.totalorder %s58, 0
    %s61 = sadd.s32 %s60, 1
    %s62 = scalar_select %p59, %s60, %s61
    %p65 = pneg %p59
    %p66 = scmp.eq.s32.totalorder %s12, 1
    %p67 = por %p65, %p66
    %p68 = scmp.ne.s32.totalorder %s60, %s63
    %p69 = scmp.eq.s32.totalorder %s12, 0
    %p70 = por %p68, %p69
    %p71 = scmp.ne.s32.totalorder %s60, %s63
    %p72 = scmp.eq.s32.totalorder %s17, 1
    %p73 = por %p71, %p72
    %p74 = scmp.ne.s32.totalorder %s63, %s64
    %p75 = scmp.eq.s32.totalorder %s17, 0
    %p76 = por %p74, %p75
    %p77 = scmp.ne.s32.totalorder %s63, %s64
    %p78 = scmp.eq.s32.totalorder %s18, 1
    %p79 = por %p77, %p78
    %p81 = scmp.ne.s32.totalorder %s64, %s80
    %p82 = scmp.eq.s32.totalorder %s18, 0
    %p83 = por %p81, %p82
    %s84 = ssub.s32 %s19, %s31
    %p85 = scmp.eq.s32.totalorder %s84, 0
    %s87 = sadd.s32 %s86, 1
    %s88 = scalar_select %p85, %s86, %s87
    %p91 = pneg %p85
    %p92 = scmp.eq.s32.totalorder %s12, 1
    %p93 = por %p91, %p92
    %p94 = scmp.ne.s32.totalorder %s86, %s89
    %p95 = scmp.eq.s32.totalorder %s12, 0
    %p96 = por %p94, %p95
    %p97 = scmp.ne.s32.totalorder %s86, %s89
    %p98 = scmp.eq.s32.totalorder %s17, 1
    %p99 = por %p97, %p98
    %p100 = scmp.ne.s32.totalorder %s89, %s90
    %p101 = scmp.eq.s32.totalorder %s17, 0
    %p102 = por %p100, %p101
    %p103 = scmp.ne.s32.totalorder %s89, %s90
    %p104 = scmp.eq.s32.totalorder %s18, 1
    %p105 = por %p103, %p104
    %p107 = scmp.ne.s32.totalorder %s90, %s106
    %p108 = scmp.eq.s32.totalorder %s18, 0
    %p109 = por %p107, %p108
    %s110 = ssub.s32 %s19, %s31
    %p111 = scmp.eq.s32.totalorder %s110, 0
    %s113 = sadd.s32 %s112, 1
    %s114 = scalar_select %p111, %s112, %s113
    %p117 = pneg %p111
    %p118 = scmp.eq.s32.totalorder %s12, 1
    %p119 = por %p117, %p118
    %p120 = scmp.ne.s32.totalorder %s112, %s115
    %p121 = scmp.eq.s32.totalorder %s12, 0
    %p122 = por %p120, %p121
    %p123 = scmp.ne.s32.totalorder %s112, %s115
    %p124 = scmp.eq.s32.totalorder %s17, 1
    %p125 = por %p123, %p124
    %p126 = scmp.ne.s32.totalorder %s115, %s116
    %p127 = scmp.eq.s32.totalorder %s17, 0
    %p128 = por %p126, %p127
    %p129 = scmp.ne.s32.totalorder %s115, %s116
    %p130 = scmp.eq.s32.totalorder %s18, 1
    %p131 = por %p129, %p130
    %p133 = scmp.ne.s32.totalorder %s116, %s132
    %p134 = scmp.eq.s32.totalorder %s18, 0
    %p135 = por %p133, %p134
    %s136 = ssub.s32 %s20, %s27
    %s137 = ssub.s32 %s19, %s31
    %s138 = sor.u32 %s136, %s137
    %p139 = scmp.eq.s32.totalorder %s138, 0
    %s141 = sadd.s32 %s140, 1
    %s142 = scalar_select %p139, %s140, %s141
    %p145 = pneg %p139
    %p146 = scmp.eq.s32.totalorder %s12, 1
    %p147 = por %p145, %p146
    %p148 = scmp.ne.s32.totalorder %s140, %s143
    %p149 = scmp.eq.s32.totalorder %s12, 0
    %p150 = por %p148, %p149
    %p151 = scmp.ne.s32.totalorder %s140, %s143
    %p152 = scmp.eq.s32.totalorder %s17, 1
    %p153 = por %p151, %p152
    %p154 = scmp.ne.s32.totalorder %s143, %s144
    %p155 = scmp.eq.s32.totalorder %s17, 0
    %p156 = por %p154, %p155
    %p157 = scmp.ne.s32.totalorder %s143, %s144
    %p158 = scmp.eq.s32.totalorder %s18, 1
    %p159 = por %p157, %p158
    %p161 = scmp.ne.s32.totalorder %s144, %s160
    %p162 = scmp.eq.s32.totalorder %s18, 0
    %p163 = por %p161, %p162
    %s164 = ssub.s32 %s20, %s27
    %s165 = ssub.s32 %s19, %s31
    %s166 = sor.u32 %s164, %s165
    %p167 = scmp.eq.s32.totalorder %s166, 0
    %s169 = sadd.s32 %s168, 1
    %s170 = scalar_select %p167, %s168, %s169
    %p173 = pneg %p167
    %p174 = scmp.eq.s32.totalorder %s12, 1
    %p175 = por %p173, %p174
    %p176 = scmp.ne.s32.totalorder %s168, %s171
    %p177 = scmp.eq.s32.totalorder %s12, 0
    %p178 = por %p176, %p177
    %p179 = scmp.ne.s32.totalorder %s168, %s171
    %p180 = scmp.eq.s32.totalorder %s17, 1
    %p181 = por %p179, %p180
    %p182 = scmp.ne.s32.totalorder %s171, %s172
    %p183 = scmp.eq.s32.totalorder %s17, 0
    %p184 = por %p182, %p183
    %p185 = scmp.ne.s32.totalorder %s171, %s172
    %p186 = scmp.eq.s32.totalorder %s18, 1
    %p187 = por %p185, %p186
    %p189 = scmp.ne.s32.totalorder %s172, %s188
    %p190 = scmp.eq.s32.totalorder %s18, 0
    %p191 = por %p189, %p190
    %p192 = scmp.le.s32.totalorder 1, %s12
    %p193 = scmp.lt.s32.totalorder %s12, 3
    %p194 = pnand %p192, %p193
    %p195 = pneg %p194
    // Predicated region
    $region9: #{fourier_layer.1} parent=5 // pred_check
      _
    $region10: #{fourier_layer.1} parent=5 // pred_check_branch
      %197 = sbr.rel (%p194) target = $region12
    $region11: #{fourier_layer.1} parent=5 // pred_region
      %s198 = ssub.s32 %s12, 1
      // Predicated region
      $region13: #{fourier_layer.1} parent=11 // pred_check
        %p199 = pneg %p102
      $region14: #{fourier_layer.1} parent=11 // pred_check_branch
        %201 = sbr.rel (%p199) target = $region16
      $region15: #{fourier_layer.1} parent=11 // pred_region
        %p202 = scmp.lt.s32.totalorder %s21, 0
        %s203 = scalar_select %p202, %s21, 0
        %s204 = smul.addr %s203, 4
        %s205 = scalar_lea.vmem %s2, %s204
      $region16: #{fourier_layer.1} parent=11 // pred_fallthru
        _
      // Predicated region
      $region17: #{fourier_layer.1} parent=11 // pred_check
        %p206 = pneg %p128
      $region18: #{fourier_layer.1} parent=11 // pred_check_branch
        %208 = sbr.rel (%p206) target = $region20
      $region19: #{fourier_layer.1} parent=11 // pred_region
        %p209 = scmp.lt.s32.totalorder %s21, 0
        %s210 = scalar_select %p209, %s21, 0
        %s211 = smul.addr %s210, 4
        %s212 = scalar_lea.vmem %s3, %s211
      $region20: #{fourier_layer.1} parent=11 // pred_fallthru
        _
    $region12: #{fourier_layer.1} parent=5 // pred_fallthru
      _
    %p213 = scmp.lt.s32.totalorder %s12, 2
    // Predicated region
    $region21: #{fourier_layer.1} parent=5 // pred_check
      %p214 = pneg %p213
    $region22: #{fourier_layer.1} parent=5 // pred_check_branch
      %216 = sbr.rel (%p214) target = $region24
    $region23: #{fourier_layer.1} parent=5 // pred_region
      // Predicated region
      $region25: #{fourier_layer.1} parent=23 // pred_check
        %p217 = pneg %p44
      $region26: #{fourier_layer.1} parent=23 // pred_check_branch
        %219 = sbr.rel (%p217) target = $region28
      $region27: #{fourier_layer.1} parent=23 // pred_region
        %p220 = scmp.lt.s32.totalorder %s20, 1
        %s221 = scalar_select %p220, %s20, 1
        %s222 = smul.addr %s221, 4
        %s223 = scalar_lea.vmem %s0, %s222
      $region28: #{fourier_layer.1} parent=23 // pred_fallthru
        _
      // Predicated region
      $region29: #{fourier_layer.1} parent=23 // pred_check
        %p224 = pneg %p70
      $region30: #{fourier_layer.1} parent=23 // pred_check_branch
        %226 = sbr.rel (%p224) target = $region32
      $region31: #{fourier_layer.1} parent=23 // pred_region
        %p227 = scmp.lt.s32.totalorder %s20, 1
        %s228 = scalar_select %p227, %s20, 1
        %s229 = smul.addr %s228, 4
        %s230 = scalar_lea.vmem %s1, %s229
      $region32: #{fourier_layer.1} parent=23 // pred_fallthru
        _
    $region24: #{fourier_layer.1} parent=5 // pred_fallthru
      _
    %p231 = scmp.le.s32.totalorder 1, %s12
    %p232 = scmp.lt.s32.totalorder %s12, 3
    %p233 = pnand %p231, %p232
    %p234 = pneg %p233
    // Predicated region
    $region33: #{fourier_layer.1} parent=5 // pred_check
      _
    $region34: #{fourier_layer.1} parent=5 // pred_check_branch
      %236 = sbr.rel (%p233) target = $region36
    $region35: #{fourier_layer.1} parent=5 // pred_region
      %s237 = ssub.s32 %s12, 1
      %p238 = scmp.lt.s32.totalorder %s22, 1
      %s239 = scalar_select %p238, %s22, 1
      %s240 = smul.addr %s239, 4
      %s241 = scalar_lea.vmem %s0, %s240
      %p242 = pneg %p50
      %p243 = pneg %p47
      %p244 = scmp.lt.s32.totalorder %s22, 1
      %s245 = scalar_select %p244, %s22, 1
      %s246 = smul.addr %s245, 4
      %s247 = scalar_lea.vmem %s1, %s246
      %p248 = pneg %p76
      %p249 = pneg %p73
      %p250 = scmp.lt.s32.totalorder %s21, 0
      %s251 = scalar_select %p250, %s21, 0
      %s252 = smul.addr %s251, 4
      %s253 = scalar_lea.vmem %s2, %s252
      %p254 = pneg %p102
      %p255 = pneg %p99
      %p256 = scmp.lt.s32.totalorder %s21, 0
      %s257 = scalar_select %p256, %s21, 0
      %s258 = smul.addr %s257, 4
      %s259 = scalar_lea.vmem %s3, %s258
      %p260 = pneg %p128
      %p261 = pneg %p125
      %p262 = pneg %p156
      %p263 = pneg %p153
      %p264 = scmp.lt.s32.totalorder %s22, 1
      %s265 = scalar_select %p264, %s22, 1
      %p266 = scmp.lt.s32.totalorder %s21, 0
      %s267 = scalar_select %p266, %s21, 0
      %s268 = sadd.s32 %s267, %s265
      %s269 = smul.addr %s268, 4
      %s270 = scalar_lea.vmem %s4, %s269
      %p271 = pneg %p184
      %p272 = pneg %p181
      %p273 = scmp.lt.s32.totalorder %s22, 1
      %s274 = scalar_select %p273, %s22, 1
      %p275 = scmp.lt.s32.totalorder %s21, 0
      %s276 = scalar_select %p275, %s21, 0
      %s277 = sadd.s32 %s276, %s274
      %s278 = smul.addr %s277, 4
      %s279 = scalar_lea.vmem %s5, %s278
      %p280 = scmp.lt.s32.totalorder %s22, 1
      %s281 = scalar_select %p280, %s22, 1
      %s282 = smul.addr %s281, 4
      %s283 = scalar_lea.vmem %s0, %s282
      %p284 = scmp.lt.s32.totalorder %s22, 1
      %s285 = scalar_select %p284, %s22, 1
      %s286 = smul.addr %s285, 4
      %s287 = scalar_lea.vmem %s1, %s286
      %p288 = scmp.lt.s32.totalorder %s21, 0
      %s289 = scalar_select %p288, %s21, 0
      %s290 = smul.addr %s289, 4
      %s291 = scalar_lea.vmem %s2, %s290
      %p292 = scmp.lt.s32.totalorder %s21, 0
      %s293 = scalar_select %p292, %s21, 0
      %s294 = smul.addr %s293, 4
      %s295 = scalar_lea.vmem %s3, %s294
      %p296 = scmp.lt.s32.totalorder %s22, 1
      %s297 = scalar_select %p296, %s22, 1
      %p298 = scmp.lt.s32.totalorder %s21, 0
      %s299 = scalar_select %p298, %s21, 0
      %s300 = sadd.s32 %s299, %s297
      %s301 = smul.addr %s300, 4
      %s302 = scalar_lea.vmem %s4, %s301
      %p303 = scmp.lt.s32.totalorder %s22, 1
      %s304 = scalar_select %p303, %s22, 1
      %p305 = scmp.lt.s32.totalorder %s21, 0
      %s306 = scalar_select %p305, %s21, 0
      %s307 = sadd.s32 %s306, %s304
      %s308 = smul.addr %s307, 4
      %s309 = scalar_lea.vmem %s5, %s308
      %v310 = vld [vmem:[%s283] sm:$0x1]
      %v311 = vld [vmem:[%s287] sm:$0x1]
      %v312 = vld [vmem:[%s291] sm:$0xf]
      %v313 = vld [vmem:[%s295] sm:$0xf]
      %v314 = vlaneseq
      %v315 = vshrl.u32 %v314, 7
      %v316 = vsub.s32 0, %v315
      %v317 = vrot.slane %v310, %v316
      %v318 = vmul.f32 %v317, %v312
      %v319 = vlaneseq
      %v320 = vshrl.u32 %v319, 7
      %v321 = vsub.s32 0, %v320
      %v322 = vrot.slane %v311, %v321
      %v323 = vmul.f32 %v322, %v313
      %v324 = vsub.f32 %v318, %v323
      %v325 = vadd.f32 %v324, 0.0
      %v326 = vmul.f32 %v317, %v313
      %v327 = vmul.f32 %v322, %v312
      %v328 = vadd.f32 %v326, %v327
      %v329 = vadd.f32 %v328, 0.0
      %v330 = vld [vmem:[%s283 + $0x1] sm:$0x1]
      %v331 = vld [vmem:[%s287 + $0x1] sm:$0x1]
      %s332 = scalar_lea.vmem %s291, 4
      %v333 = vld [vmem:[%s332] sm:$0xf]
      %s334 = scalar_lea.vmem %s295, 4
      %v335 = vld [vmem:[%s334] sm:$0xf]
      %v336 = vlaneseq
      %v337 = vshrl.u32 %v336, 7
      %v338 = vsub.s32 0, %v337
      %v339 = vrot.slane %v330, %v338
      %v340 = vmul.f32 %v339, %v333
      %v341 = vlaneseq
      %v342 = vshrl.u32 %v341, 7
      %v343 = vsub.s32 0, %v342
      %v344 = vrot.slane %v331, %v343
      %v345 = vmul.f32 %v344, %v335
      %v346 = vsub.f32 %v340, %v345
      %v347 = vadd.f32 %v325, %v346
      %v348 = vmul.f32 %v339, %v335
      %v349 = vmul.f32 %v344, %v333
      %v350 = vadd.f32 %v348, %v349
      %v351 = vadd.f32 %v329, %v350
      %v352 = vld [vmem:[%s283 + $0x2] sm:$0x1]
      %v353 = vld [vmem:[%s287 + $0x2] sm:$0x1]
      %s354 = scalar_lea.vmem %s291, 8
      %v355 = vld [vmem:[%s354] sm:$0xf]
      %s356 = scalar_lea.vmem %s295, 8
      %v357 = vld [vmem:[%s356] sm:$0xf]
      %v358 = vlaneseq
      %v359 = vshrl.u32 %v358, 7
      %v360 = vsub.s32 0, %v359
      %v361 = vrot.slane %v352, %v360
      %v362 = vmul.f32 %v361, %v355
      %v363 = vlaneseq
      %v364 = vshrl.u32 %v363, 7
      %v365 = vsub.s32 0, %v364
      %v366 = vrot.slane %v353, %v365
      %v367 = vmul.f32 %v366, %v357
      %v368 = vsub.f32 %v362, %v367
      %v369 = vadd.f32 %v347, %v368
      %v370 = vmul.f32 %v361, %v357
      %v371 = vmul.f32 %v366, %v355
      %v372 = vadd.f32 %v370, %v371
      %v373 = vadd.f32 %v351, %v372
      %v374 = vld [vmem:[%s283 + $0x3] sm:$0x1]
      %v375 = vld [vmem:[%s287 + $0x3] sm:$0x1]
      %s376 = scalar_lea.vmem %s291, 12
      %v377 = vld [vmem:[%s376] sm:$0xf]
      %s378 = scalar_lea.vmem %s295, 12
      %v379 = vld [vmem:[%s378] sm:$0xf]
      %v380 = vlaneseq
      %v381 = vshrl.u32 %v380, 7
      %v382 = vsub.s32 0, %v381
      %v383 = vrot.slane %v374, %v382
      %v384 = vmul.f32 %v383, %v377
      %v385 = vlaneseq
      %v386 = vshrl.u32 %v385, 7
      %v387 = vsub.s32 0, %v386
      %v388 = vrot.slane %v375, %v387
      %v389 = vmul.f32 %v388, %v379
      %v390 = vsub.f32 %v384, %v389
      %v391 = vadd.f32 %v369, %v390
      %v392 = vmul.f32 %v383, %v379
      %v393 = vmul.f32 %v388, %v377
      %v394 = vadd.f32 %v392, %v393
      %v395 = vadd.f32 %v373, %v394
      %396 = vst [vmem:[%s302] sm:$0xf] %v391
      %397 = vst [vmem:[%s309] sm:$0xf] %v395
      %p398 = scmp.lt.s32.totalorder %s22, 1
      %s399 = scalar_select %p398, %s22, 1
      %p400 = scmp.lt.s32.totalorder %s21, 0
      %s401 = scalar_select %p400, %s21, 0
      %s402 = sadd.s32 %s401, %s399
      %s403 = smul.addr %s402, 4
      %s404 = scalar_lea.vmem %s4, %s403
      %p405 = scmp.lt.s32.totalorder %s22, 1
      %s406 = scalar_select %p405, %s22, 1
      %p407 = scmp.lt.s32.totalorder %s21, 0
      %s408 = scalar_select %p407, %s21, 0
      %s409 = sadd.s32 %s408, %s406
      %s410 = smul.addr %s409, 4
      %s411 = scalar_lea.vmem %s5, %s410
      // Predicated region
      $region37: #{fourier_layer.1} parent=35 // pred_check
        %p412 = pneg %p153
      $region38: #{fourier_layer.1} parent=35 // pred_check_branch
        %414 = sbr.rel (%p412) target = $region40
      $region39: #{fourier_layer.1} parent=35 // pred_region
        _
      $region40: #{fourier_layer.1} parent=35 // pred_fallthru
        _
      // Predicated region
      $region41: #{fourier_layer.1} parent=35 // pred_check
        %p415 = pneg %p181
      $region42: #{fourier_layer.1} parent=35 // pred_check_branch
        %417 = sbr.rel (%p415) target = $region44
      $region43: #{fourier_layer.1} parent=35 // pred_region
        _
      $region44: #{fourier_layer.1} parent=35 // pred_fallthru
        _
    $region36: #{fourier_layer.1} parent=5 // pred_fallthru
      _
    %p418 = scmp.le.s32.totalorder 2, %s12
    // Predicated region
    $region45: #{fourier_layer.1} parent=5 // pred_check
      %p419 = pneg %p418
    $region46: #{fourier_layer.1} parent=5 // pred_check_branch
      %421 = sbr.rel (%p419) target = $region48
    $region47: #{fourier_layer.1} parent=5 // pred_region
      %s422 = ssub.s32 %s12, 2
      // Predicated region
      $region49: #{fourier_layer.1} parent=47 // pred_check
        %p423 = pneg %p159
      $region50: #{fourier_layer.1} parent=47 // pred_check_branch
        %425 = sbr.rel (%p423) target = $region52
      $region51: #{fourier_layer.1} parent=47 // pred_region
        %p426 = scmp.lt.s32.totalorder %s24, 1
        %s427 = scalar_select %p426, %s24, 1
        %p428 = scmp.lt.s32.totalorder %s23, 0
        %s429 = scalar_select %p428, %s23, 0
        %s430 = sadd.s32 %s429, %s427
        %s431 = smul.addr %s430, 4
        %s432 = scalar_lea.vmem %s4, %s431
      $region52: #{fourier_layer.1} parent=47 // pred_fallthru
        _
      // Predicated region
      $region53: #{fourier_layer.1} parent=47 // pred_check
        %p433 = pneg %p187
      $region54: #{fourier_layer.1} parent=47 // pred_check_branch
        %435 = sbr.rel (%p433) target = $region56
      $region55: #{fourier_layer.1} parent=47 // pred_region
        %p436 = scmp.lt.s32.totalorder %s24, 1
        %s437 = scalar_select %p436, %s24, 1
        %p438 = scmp.lt.s32.totalorder %s23, 0
        %s439 = scalar_select %p438, %s23, 0
        %s440 = sadd.s32 %s439, %s437
        %s441 = smul.addr %s440, 4
        %s442 = scalar_lea.vmem %s5, %s441
      $region56: #{fourier_layer.1} parent=47 // pred_fallthru
        _
    $region48: #{fourier_layer.1} parent=5 // pred_fallthru
      _
  $region6: #{fourier_layer.1} parent=0 // loop_footer
    %s16 = sadd.s32 1, %s12
  $region7: #{fourier_layer.1} parent=0 // loop_footer_branch
    %11 = sbr.rel target = $region3
  $region8: #{fourier_layer.1} parent=0 // loop_exit
    _

</llo_original>
